<compile_context>
chip_gen: v7x
topology: tpu7x:2x2x1
jax: 0.10.0
libtpu: 0.0.40
codegen_flags: <defaults>
</compile_context>

<pallas_src>
import functools

import jax
import jax.numpy as jnp
import numpy as np
from jax.experimental import pallas as pl
from jax.experimental.pallas import tpu as pltpu

POOL_SIZES = (1, 2, 3, 6)
TOTAL_POS = sum(k * k for k in POOL_SIZES)  # 1 + 4 + 9 + 36 = 50
BN_EPS = 1e-5


def adaptive_pool_matrix(H, W, k):
    """Pooling matrix (k*k, H*W) with exact nn.AdaptiveAvgPool2d semantics."""
    P = np.zeros((k * k, H * W), dtype=np.float32)
    for i in range(k):
        h0 = (i * H) // k
        h1 = -((-(i + 1) * H) // k)  # ceil((i+1)*H/k)
        for j in range(k):
            w0 = (j * W) // k
            w1 = -((-(j + 1) * W) // k)
            cnt = float((h1 - h0) * (w1 - w0))
            for hh in range(h0, h1):
                for ww in range(w0, w1):
                    P[i * k + j, hh * W + ww] = 1.0 / cnt
    return P


def _pool_matrix_all(H, W):
    """Fused pooling matrix for all four branches: (50, H*W)."""
    return np.concatenate([adaptive_pool_matrix(H, W, k) for k in POOL_SIZES],
                          axis=0)


def _branch_index():
    """Branch id (0..3) for each of the 50 output positions."""
    return np.concatenate(
        [np.full(k * k, i, dtype=np.int32) for i, k in enumerate(POOL_SIZES)])


def cpam_enc_kernel(x_ref, pt_ref, w_ref, scale_ref, shift_ref, out_ref, *,
                    bt, c):
    # x_ref: (bt*c, HW)   pt_ref: (HW, 50)   w_ref: (4c, c)
    # scale_ref: (4c, 50) (branch-masked BN scale)   shift_ref: (c, 50)
    # One fused pooling GEMM for the whole batch block.
    pooled = jnp.dot(x_ref[...], pt_ref[...],
                     preferred_element_type=jnp.float32)  # (bt*c, 50)
    for b in range(bt):  # tiny static unroll over batch elements in the block
        pb = pooled[b * c:(b + 1) * c, :]                  # (c, 50), aligned
        # All four 1x1 convs as one GEMM: (4c, c) @ (c, 50) -> (4c, 50)
        z = jnp.dot(w_ref[...], pb, preferred_element_type=jnp.float32)
        # Branch selection + BN scale folded into one constant multiply.
        zs = z * scale_ref[...]                            # (4c, 50)
        acc = (zs[0:c, :] + zs[c:2 * c, :]
               + zs[2 * c:3 * c, :] + zs[3 * c:4 * c, :])  # (c, 50)
        out_ref[pl.ds(b * c, c), :] = jnp.maximum(acc + shift_ref[...], 0.0)


@functools.partial(jax.jit, static_argnames=("batch_block",))
def cpam_enc(x_nchw, weights, scale, shift, batch_block=None):
    """x_nchw: (B, C, H, W) f32; weights: 4x (C, C); scale/shift: (4, C).

    Returns (B, C, 50) matching PyTorch CPAMEnc.forward (eval-mode BN).
    """
    B, C, H, W = x_nchw.shape
    HW = H * W

    # Choose how many batch elements a grid step handles: amortizes grid-step
    # overhead and fills the MXU M dim, under a modest VMEM budget for the
    # double-buffered x block.  Keep bt*C sublane-aligned when possible.
    if batch_block is None:
        budget = 8 * 1024 * 1024
        bt = 1
        for cand in range(1, B + 1):
            if B % cand != 0:
                continue
            if (cand * C) % 8 != 0 and cand != B:
                continue
            if 2 * cand * C * HW * 4 <= budget:
                bt = cand
        batch_block = bt
    bt = batch_block
    assert B % bt == 0

    # Free row-major reshape: no HBM transpose of x.
    x_flat = x_nchw.reshape(B * C, HW)

    # Fused + pre-transposed pooling matrix: (HW, 50).
    pt = jnp.asarray(_pool_matrix_all(H, W).T)

    # Stacked 1x1 conv weights: (4C, C); row k*C + c_out is W_k[c_out, :].
    w_stack = jnp.concatenate(weights, axis=0)

    # Branch-masked BN scale (4C, 50) and expanded BN shift (C, 50).
    branch = _branch_index()                                        # (50,)
    onehot = np.asarray(branch[None, :] == np.arange(4)[:, None],
                        dtype=np.float32)                           # (4, 50)
    scale_sel = (scale[:, :, None] * jnp.asarray(onehot)[:, None, :]
                 ).reshape(4 * C, TOTAL_POS)                        # (4C, 50)
    shift_exp = jnp.take(shift, jnp.asarray(branch), axis=0).T      # (C, 50)

    kernel = functools.partial(cpam_enc_kernel, bt=bt, c=C)
    const = lambda shape: pl.BlockSpec(shape, lambda i: (0, 0))

    out_flat = pl.pallas_call(
        kernel,
        out_shape=jax.ShapeDtypeStruct((B * C, TOTAL_POS), jnp.float32),
        grid=(B // bt,),
        in_specs=[
            pl.BlockSpec((bt * C, HW), lambda i: (i, 0)),   # x block
            const((HW, TOTAL_POS)),                          # P_all^T
            const((4 * C, C)),                               # stacked weights
            const((4 * C, TOTAL_POS)),                       # masked BN scale
            const((C, TOTAL_POS)),                           # expanded BN shift
        ],
        out_specs=pl.BlockSpec((bt * C, TOTAL_POS), lambda i: (i, 0)),
        compiler_params=pltpu.CompilerParams(
            dimension_semantics=("parallel",)),
    )(x_flat, pt, w_stack, scale_sel, shift_exp)

    # Free reshape back to the PyTorch output layout (B, C, 50).
    return out_flat.reshape(B, C, TOTAL_POS)


def reference(x_nchw, weights, scale, shift):
    """Pure-JAX reference for correctness checking (eval-mode BN)."""
    B, C, H, W = x_nchw.shape
    x = x_nchw.reshape(B, C, H * W)
    feats = []
    for k_idx, (ksize, Wk) in enumerate(zip(POOL_SIZES, weights)):
        P = jnp.asarray(adaptive_pool_matrix(H, W, ksize))
        pooled = jnp.einsum('ph,bch->bcp', P, x)          # adaptive avg pool
        y = jnp.einsum('oc,bcp->bop', Wk, pooled)         # 1x1 conv, no bias
        y = y * scale[k_idx][None, :, None] + shift[k_idx][None, :, None]
        y = jnp.maximum(y, 0.0)
        feats.append(y)
    return jnp.concatenate(feats, axis=2)


if __name__ == "__main__":
    B, C, H, W = 2, 32, 12, 12
    key = jax.random.PRNGKey(0)
    keys = jax.random.split(key, 10)

    x = jax.random.normal(keys[0], (B, C, H, W), dtype=jnp.float32)

    # 1x1 conv weights (out_ch, in_ch), no bias.
    weights = tuple(
        0.1 * jax.random.normal(keys[1 + i], (C, C), dtype=jnp.float32)
        for i in range(4)
    )
    # BatchNorm (inference mode) params per branch, folded to affine.
    # TODO(synk): training-mode BN (batch statistics) not implemented; eval-mode running stats used.
    gamma = 1.0 + 0.1 * jax.random.normal(keys[5], (4, C), dtype=jnp.float32)
    beta = 0.1 * jax.random.normal(keys[6], (4, C), dtype=jnp.float32)
    run_mean = 0.1 * jax.random.normal(keys[7], (4, C), dtype=jnp.float32)
    run_var = jnp.abs(jax.random.normal(keys[8], (4, C), dtype=jnp.float32)) + 0.5
    scale = gamma / jnp.sqrt(run_var + BN_EPS)
    shift = beta - run_mean * scale

    out = cpam_enc(x, weights, scale, shift)
    out = jax.block_until_ready(out)

    ref = jax.block_until_ready(reference(x, weights, scale, shift))
    assert out.shape == (B, C, TOTAL_POS), out.shape
    np.testing.assert_allclose(np.asarray(out), np.asarray(ref),
                               rtol=1e-4, atol=1e-5)
    print("KERNEL_OK")
</pallas_src>

<mosaic_0001>
module attributes {stable_mosaic.version = 11 : i64} {
  func.func @cpam_enc_kernel(%arg0: i32, %arg1: memref<64x144xf32, #tpu.memory_space<vmem>>, %arg2: memref<144x50xf32, #tpu.memory_space<vmem>>, %arg3: memref<128x32xf32, #tpu.memory_space<vmem>>, %arg4: memref<128x50xf32, #tpu.memory_space<vmem>>, %arg5: memref<32x50xf32, #tpu.memory_space<vmem>>, %arg6: memref<64x50xf32, #tpu.memory_space<vmem>>) attributes {dimension_semantics = [#tpu.dimension_semantics<parallel>], iteration_bounds = array<i64: 1>, scalar_prefetch = 0 : i64, scratch_operands = 0 : i64, tpu.core_type = #tpu.core_type<tc>, window_params = [{transform_indices = @transform_0, window_bounds = array<i64: 64, 144>}, {pipeline_mode = #tpu.pipeline_mode<synchronous>, transform_indices = @transform_1, window_bounds = array<i64: 144, 50>}, {pipeline_mode = #tpu.pipeline_mode<synchronous>, transform_indices = @transform_2, window_bounds = array<i64: 128, 32>}, {pipeline_mode = #tpu.pipeline_mode<synchronous>, transform_indices = @transform_3, window_bounds = array<i64: 128, 50>}, {pipeline_mode = #tpu.pipeline_mode<synchronous>, transform_indices = @transform_4, window_bounds = array<i64: 32, 50>}, {transform_indices = @transform_5, window_bounds = array<i64: 64, 50>}]} {
    %c0 = arith.constant 0 : index
    %c0_0 = arith.constant 0 : index
    %0 = vector.load %arg1[%c0, %c0_0] : memref<64x144xf32, #tpu.memory_space<vmem>>, vector<64x144xf32>
    %c0_1 = arith.constant 0 : index
    %c0_2 = arith.constant 0 : index
    %1 = vector.load %arg2[%c0_1, %c0_2] : memref<144x50xf32, #tpu.memory_space<vmem>>, vector<144x50xf32>
    %cst = arith.constant dense<0.000000e+00> : vector<64x50xf32>
    %2 = tpu.matmul %0, %1, %cst {dimension_numbers = #tpu.dot_dimension_numbers<[1], [0], [0], [1], [0, 0, 1, 1], [], []>} : vector<64x144xf32>, vector<144x50xf32>, vector<64x50xf32> -> vector<64x50xf32>
    %3 = vector.extract_strided_slice %2 {offsets = [0, 0], sizes = [32, 50], strides = [1, 1]} : vector<64x50xf32> to vector<32x50xf32>
    %c0_3 = arith.constant 0 : index
    %c0_4 = arith.constant 0 : index
    %4 = vector.load %arg3[%c0_3, %c0_4] : memref<128x32xf32, #tpu.memory_space<vmem>>, vector<128x32xf32>
    %cst_5 = arith.constant dense<0.000000e+00> : vector<128x50xf32>
    %5 = tpu.matmul %4, %3, %cst_5 {dimension_numbers = #tpu.dot_dimension_numbers<[1], [0], [0], [1], [0, 0, 1, 1], [], []>} : vector<128x32xf32>, vector<32x50xf32>, vector<128x50xf32> -> vector<128x50xf32>
    %c0_6 = arith.constant 0 : index
    %c0_7 = arith.constant 0 : index
    %6 = vector.load %arg4[%c0_6, %c0_7] : memref<128x50xf32, #tpu.memory_space<vmem>>, vector<128x50xf32>
    %7 = arith.mulf %5, %6 : vector<128x50xf32>
    %8 = vector.extract_strided_slice %7 {offsets = [0, 0], sizes = [32, 50], strides = [1, 1]} : vector<128x50xf32> to vector<32x50xf32>
    %9 = vector.extract_strided_slice %7 {offsets = [32, 0], sizes = [32, 50], strides = [1, 1]} : vector<128x50xf32> to vector<32x50xf32>
    %10 = arith.addf %8, %9 : vector<32x50xf32>
    %11 = vector.extract_strided_slice %7 {offsets = [64, 0], sizes = [32, 50], strides = [1, 1]} : vector<128x50xf32> to vector<32x50xf32>
    %12 = arith.addf %10, %11 : vector<32x50xf32>
    %13 = vector.extract_strided_slice %7 {offsets = [96, 0], sizes = [32, 50], strides = [1, 1]} : vector<128x50xf32> to vector<32x50xf32>
    %14 = arith.addf %12, %13 : vector<32x50xf32>
    %c0_8 = arith.constant 0 : index
    %c0_9 = arith.constant 0 : index
    %15 = vector.load %arg5[%c0_8, %c0_9] : memref<32x50xf32, #tpu.memory_space<vmem>>, vector<32x50xf32>
    %16 = arith.addf %14, %15 : vector<32x50xf32>
    %cst_10 = arith.constant 0.000000e+00 : f32
    %17 = vector.broadcast %cst_10 : f32 to vector<32x50xf32>
    %18 = arith.maximumf %16, %17 : vector<32x50xf32>
    %c0_11 = arith.constant 0 : index
    %c0_12 = arith.constant 0 : index
    %19 = vector.load %arg6[%c0_11, %c0_12] : memref<64x50xf32, #tpu.memory_space<vmem>>, vector<32x50xf32>
    tpu.vector_store %arg6[%c0_11, %c0_12], %18 {strides = array<i32>} : memref<64x50xf32, #tpu.memory_space<vmem>>, vector<32x50xf32>,
    %20 = vector.extract_strided_slice %2 {offsets = [32, 0], sizes = [32, 50], strides = [1, 1]} : vector<64x50xf32> to vector<32x50xf32>
    %c0_13 = arith.constant 0 : index
    %c0_14 = arith.constant 0 : index
    %21 = vector.load %arg3[%c0_13, %c0_14] : memref<128x32xf32, #tpu.memory_space<vmem>>, vector<128x32xf32>
    %cst_15 = arith.constant dense<0.000000e+00> : vector<128x50xf32>
    %22 = tpu.matmul %21, %20, %cst_15 {dimension_numbers = #tpu.dot_dimension_numbers<[1], [0], [0], [1], [0, 0, 1, 1], [], []>} : vector<128x32xf32>, vector<32x50xf32>, vector<128x50xf32> -> vector<128x50xf32>
    %c0_16 = arith.constant 0 : index
    %c0_17 = arith.constant 0 : index
    %23 = vector.load %arg4[%c0_16, %c0_17] : memref<128x50xf32, #tpu.memory_space<vmem>>, vector<128x50xf32>
    %24 = arith.mulf %22, %23 : vector<128x50xf32>
    %25 = vector.extract_strided_slice %24 {offsets = [0, 0], sizes = [32, 50], strides = [1, 1]} : vector<128x50xf32> to vector<32x50xf32>
    %26 = vector.extract_strided_slice %24 {offsets = [32, 0], sizes = [32, 50], strides = [1, 1]} : vector<128x50xf32> to vector<32x50xf32>
    %27 = arith.addf %25, %26 : vector<32x50xf32>
    %28 = vector.extract_strided_slice %24 {offsets = [64, 0], sizes = [32, 50], strides = [1, 1]} : vector<128x50xf32> to vector<32x50xf32>
    %29 = arith.addf %27, %28 : vector<32x50xf32>
    %30 = vector.extract_strided_slice %24 {offsets = [96, 0], sizes = [32, 50], strides = [1, 1]} : vector<128x50xf32> to vector<32x50xf32>
    %31 = arith.addf %29, %30 : vector<32x50xf32>
    %c0_18 = arith.constant 0 : index
    %c0_19 = arith.constant 0 : index
    %32 = vector.load %arg5[%c0_18, %c0_19] : memref<32x50xf32, #tpu.memory_space<vmem>>, vector<32x50xf32>
    %33 = arith.addf %31, %32 : vector<32x50xf32>
    %cst_20 = arith.constant 0.000000e+00 : f32
    %34 = vector.broadcast %cst_20 : f32 to vector<32x50xf32>
    %35 = arith.maximumf %33, %34 : vector<32x50xf32>
    %c32 = arith.constant 32 : index
    %c0_21 = arith.constant 0 : index
    %36 = vector.load %arg6[%c32, %c0_21] : memref<64x50xf32, #tpu.memory_space<vmem>>, vector<32x50xf32>
    tpu.vector_store %arg6[%c32, %c0_21], %35 {strides = array<i32>} : memref<64x50xf32, #tpu.memory_space<vmem>>, vector<32x50xf32>,
    return
  }
  func.func @transform_0(%arg0: i32) -> (i32, i32) {
    %c0_i32 = arith.constant 0 : i32
    %c0_i32_0 = arith.constant 0 : i32
    return %arg0, %c0_i32 : i32, i32
  }
  func.func @transform_1(%arg0: i32) -> (i32, i32) {
    %c0_i32 = arith.constant 0 : i32
    %c0_i32_0 = arith.constant 0 : i32
    %c0_i32_1 = arith.constant 0 : i32
    return %c0_i32, %c0_i32_0 : i32, i32
  }
  func.func @transform_2(%arg0: i32) -> (i32, i32) {
    %c0_i32 = arith.constant 0 : i32
    %c0_i32_0 = arith.constant 0 : i32
    %c0_i32_1 = arith.constant 0 : i32
    return %c0_i32, %c0_i32_0 : i32, i32
  }
  func.func @transform_3(%arg0: i32) -> (i32, i32) {
    %c0_i32 = arith.constant 0 : i32
    %c0_i32_0 = arith.constant 0 : i32
    %c0_i32_1 = arith.constant 0 : i32
    return %c0_i32, %c0_i32_0 : i32, i32
  }
  func.func @transform_4(%arg0: i32) -> (i32, i32) {
    %c0_i32 = arith.constant 0 : i32
    %c0_i32_0 = arith.constant 0 : i32
    %c0_i32_1 = arith.constant 0 : i32
    return %c0_i32, %c0_i32_0 : i32, i32
  }
  func.func @transform_5(%arg0: i32) -> (i32, i32) {
    %c0_i32 = arith.constant 0 : i32
    %c0_i32_0 = arith.constant 0 : i32
    return %arg0, %c0_i32 : i32, i32
  }
}

</mosaic_0001>

<llo_original>
// kernel: cpam_enc.1
$region0: #{cpam_enc.1}
  #allocation0 [shape = 'u32[]', space=smem, size = 0x4, offset = 0x4, fixed_abs, tag = 'smem constant byte address 0x4 - core index']
  #allocation1 [shape = 'u32[144,128]{1,0:T(1,128)}', space=vmem, size = 0x12000, scoped, tag = 'internal scratch']
  %s0 = inlined_call_operand.vmem [shape: f32[64,144], index: 0, kind: input, shape index: {}]
  %s1 = inlined_call_operand.vmem [shape: f32[144,50], index: 1, kind: input, shape index: {}]
  %s2 = inlined_call_operand.vmem [shape: f32[128,32], index: 2, kind: input, shape index: {}]
  %s3 = inlined_call_operand.vmem [shape: f32[128,50], index: 3, kind: input, shape index: {}]
  %s4 = inlined_call_operand.vmem [shape: f32[32,50], index: 4, kind: input, shape index: {}]
  %s5 = inlined_call_operand.hbm [shape: f32[64,50], index: 5, kind: output, shape index: {}]
  %s6 = sld [smem:[#allocation0]]
  $region30: #{cpam_enc.1} parent=0
    _
  %s8 = ssub.s32 1, %s6
  %s9 = scalar_select 0, %s8, %s6
  $region1: #{cpam_enc.1} parent=0
    #allocation2 [shape = 'u8[32768]{0}', space=vmem, size = 0x8000, scoped, tag = 'output window, operand 0, single buffered']
    #allocation3 [shape = 's32[1]{0}', space=sflag, size = 0x4, scoped, tag = 'scoped memory for cpam_enc.1']
    %10 = vsyncpa [#allocation3], 0
    // Predicated region
    $region2: #{cpam_enc.1} parent=1 // pred_check
      _
    $region3: #{cpam_enc.1} parent=1 // pred_check_branch
      %12 = sbr.rel (0) target = $region5
    $region4: #{cpam_enc.1} parent=1 // pred_region
      _
    $region5: #{cpam_enc.1} parent=1 // pred_fallthru
      _
    // Predicated region
    $region6: #{cpam_enc.1} parent=1 // pred_check
      _
    $region7: #{cpam_enc.1} parent=1 // pred_check_branch
      %14 = sbr.rel (0) target = $region9
    $region8: #{cpam_enc.1} parent=1 // pred_region
      _
    $region9: #{cpam_enc.1} parent=1 // pred_fallthru
      _
    // Predicated region
    $region10: #{cpam_enc.1} parent=1 // pred_check
      _
    $region11: #{cpam_enc.1} parent=1 // pred_check_branch
      %16 = sbr.rel (0) target = $region13
    $region12: #{cpam_enc.1} parent=1 // pred_region
      _
    $region13: #{cpam_enc.1} parent=1 // pred_fallthru
      _
    // Predicated region
    $region14: #{cpam_enc.1} parent=1 // pred_check
      _
    $region15: #{cpam_enc.1} parent=1 // pred_check_branch
      %18 = sbr.rel (0) target = $region17
    $region16: #{cpam_enc.1} parent=1 // pred_region
      _
    $region17: #{cpam_enc.1} parent=1 // pred_fallthru
      _
    // Predicated region
    $region18: #{cpam_enc.1} parent=1 // pred_check
      _
    $region19: #{cpam_enc.1} parent=1 // pred_check_branch
      %20 = sbr.rel (0) target = $region21
    $region20: #{cpam_enc.1} parent=1 // pred_region
      _
    $region21: #{cpam_enc.1} parent=1 // pred_fallthru
      _
    %v21 = vld [vmem:[%s0] sm:$0xff]
    %v22 = vld [vmem:[%s0 + $0x8] sm:$0xff]
    %v23 = vld [vmem:[%s0 + $0x10] sm:$0xff]
    %v24 = vld [vmem:[%s0 + $0x18] sm:$0xff]
    %v25 = vld [vmem:[%s0 + $0x20] sm:$0xff]
    %v26 = vld [vmem:[%s0 + $0x28] sm:$0xff]
    %v27 = vld [vmem:[%s0 + $0x30] sm:$0xff]
    %v28 = vld [vmem:[%s0 + $0x38] sm:$0xff]
    %v29 = vld [vmem:[%s0 + $0x40] sm:$0xff]
    %v30 = vld [vmem:[%s0 + $0x48] sm:$0xff]
    %v31 = vld [vmem:[%s0 + $0x50] sm:$0xff]
    %v32 = vld [vmem:[%s0 + $0x58] sm:$0xff]
    %v33 = vld [vmem:[%s0 + $0x60] sm:$0xff]
    %v34 = vld [vmem:[%s0 + $0x68] sm:$0xff]
    %v35 = vld [vmem:[%s0 + $0x70] sm:$0xff]
    %v36 = vld [vmem:[%s0 + $0x78] sm:$0xff]
    %v37 = vld [vmem:[%s1] sm:$0xff]
    %v38 = vld [vmem:[%s1 + $0x8] sm:$0xff]
    %v39 = vld [vmem:[%s1 + $0x10] sm:$0xff]
    %v40 = vld [vmem:[%s1 + $0x18] sm:$0xff]
    %v41 = vld [vmem:[%s1 + $0x20] sm:$0xff]
    %v42 = vld [vmem:[%s1 + $0x28] sm:$0xff]
    %v43 = vld [vmem:[%s1 + $0x30] sm:$0xff]
    %v44 = vld [vmem:[%s1 + $0x38] sm:$0xff]
    %v45 = vld [vmem:[%s1 + $0x40] sm:$0xff]
    %v46 = vld [vmem:[%s1 + $0x48] sm:$0xff]
    %v47 = vld [vmem:[%s1 + $0x50] sm:$0xff]
    %v48 = vld [vmem:[%s1 + $0x58] sm:$0xff]
    %v49 = vld [vmem:[%s1 + $0x60] sm:$0xff]
    %v50 = vld [vmem:[%s1 + $0x68] sm:$0xff]
    %v51 = vld [vmem:[%s1 + $0x70] sm:$0xff]
    %v52 = vld [vmem:[%s1 + $0x78] sm:$0xff]
    %v53 = vld [vmem:[%s1 + $0x80] sm:$0xff]
    %v54 = vld [vmem:[%s1 + $0x88] sm:$0xff]
    %vm55 = vcmask 130048
    %v57 = vsel %vm55, %v22, 0
    %v60 = vsel %vm55, %v24, 0
    %v63 = vsel %vm55, %v26, 0
    %v66 = vsel %vm55, %v28, 0
    %v69 = vsel %vm55, %v30, 0
    %v72 = vsel %vm55, %v32, 0
    %v75 = vsel %vm55, %v34, 0
    %v78 = vsel %vm55, %v36, 0
    %80 = vmatprep.subr.mxu0 0.0
    %81 = vmatpush1.msra.mxu0 %v37
    %82 = vmatprep.subr.mxu0 0.0
    %83 = vmatpush1.msra.mxu0 %v38
    %84 = vmatprep.subr.mxu0 0.0
    %85 = vmatpush1.msra.mxu0 %v39
    %86 = vmatprep.subr.mxu0 0.0
    %87 = vmatpush1.msra.mxu0 %v40
    %88 = vmatprep.subr.mxu0 0.0
    %89 = vmatpush1.msra.mxu0 %v41
    %90 = vmatprep.subr.mxu0 0.0
    %91 = vmatpush1.msra.mxu0 %v42
    %92 = vmatprep.subr.mxu0 0.0
    %93 = vmatpush1.msra.mxu0 %v43
    %94 = vmatprep.subr.mxu0 0.0
    %95 = vmatpush1.msra.mxu0 %v44
    %96 = vmatprep.subr.mxu0 0.0
    %97 = vmatpush1.msra.mxu0 %v45
    %98 = vmatprep.subr.mxu0 0.0
    %99 = vmatpush1.msra.mxu0 %v46
    %100 = vmatprep.subr.mxu0 0.0
    %101 = vmatpush1.msra.mxu0 %v47
    %102 = vmatprep.subr.mxu0 0.0
    %103 = vmatpush1.msra.mxu0 %v48
    %104 = vmatprep.subr.mxu0 0.0
    %105 = vmatpush1.msra.mxu0 %v49
    %106 = vmatprep.subr.mxu0 0.0
    %107 = vmatpush1.msra.mxu0 %v50
    %108 = vmatprep.subr.mxu0 0.0
    %109 = vmatpush1.msra.mxu0 %v51
    %110 = vmatprep.subr.mxu0 0.0
    %111 = vmatpush1.msra.mxu0 %v52
    %112 = vmatprep.subr.mxu0 0.0
    %113 = vmatpush1.msra.mxu0 %v53
    %114 = vmatprep.subr.mxu0 0.0
    %115 = vmatpush1.msra.mxu0 %v54
    %116 = vmatprep.subr.mxu0 0.0
    %117 = vmatpush1.msra.mxu0 0.0
    %118 = vmatprep.subr.mxu0 0.0
    %119 = vmatpush1.msra.mxu0 0.0
    %120 = vmatprep.subr.mxu0 0.0
    %121 = vmatpush1.msra.mxu0 0.0
    %122 = vmatprep.subr.mxu0 0.0
    %123 = vmatpush1.msra.mxu0 0.0
    %124 = vmatprep.subr.mxu0 0.0
    %125 = vmatpush1.msra.mxu0 0.0
    %126 = vmatprep.subr.mxu0 0.0
    %127 = vmatpush1.msra.mxu0 0.0
    %128 = vmatprep.subr.mxu0 0.0
    %129 = vmatpush1.msra.mxu0 0.0
    %130 = vmatprep.subr.mxu0 0.0
    %131 = vmatpush1.msra.mxu0 0.0
    %132 = vmatprep.subr.mxu0 0.0
    %133 = vmatpush1.msra.mxu0 0.0
    %134 = vmatprep.subr.mxu0 0.0
    %135 = vmatpush1.msra.mxu0 0.0
    %136 = vmatprep.subr.mxu0 0.0
    %137 = vmatpush1.msra.mxu0 0.0
    %138 = vmatprep.subr.mxu0 0.0
    %139 = vmatpush1.msra.mxu0 0.0
    %140 = vmatprep.subr.mxu0 0.0
    %141 = vmatpush1.msra.mxu0 0.0
    %142 = vmatprep.subr.mxu0 0.0
    %143 = vmatpush1.msra.mxu0 0.0
    %144 = vmatprep.mubr.f32.mxu0 %v57
    %145 = vmatmul.mubr.f32.gmra.mrb[0].mxu0 %v21
    %v146 = vpop.f32.mrb[0].mxu0
    %v147 = vadd.f32 0.0, %v146
    %v148 = vpop.f32.mrb[0].mxu0
    %149 = vmatprep.mubr.f32.mxu0 %v60
    %150 = vmatmul.mubr.f32.gmra.mrb[0].mxu0 %v23
    %v151 = vpop.f32.mrb[0].mxu0
    %v152 = vadd.f32 0.0, %v151
    %v153 = vpop.f32.mrb[0].mxu0
    %154 = vmatprep.mubr.f32.mxu0 %v63
    %155 = vmatmul.mubr.f32.gmra.mrb[0].mxu0 %v25
    %v156 = vpop.f32.mrb[0].mxu0
    %v157 = vadd.f32 0.0, %v156
    %v158 = vpop.f32.mrb[0].mxu0
    %159 = vmatprep.mubr.f32.mxu0 %v66
    %160 = vmatmul.mubr.f32.gmra.mrb[0].mxu0 %v27
    %v161 = vpop.f32.mrb[0].mxu0
    %v162 = vadd.f32 0.0, %v161
    %v163 = vpop.f32.mrb[0].mxu0
    %164 = vmatprep.mubr.f32.mxu0 %v69
    %165 = vmatmul.mubr.f32.gmra.mrb[0].mxu0 %v29
    %v166 = vpop.f32.mrb[0].mxu0
    %v167 = vadd.f32 0.0, %v166
    %v168 = vpop.f32.mrb[0].mxu0
    %169 = vmatprep.mubr.f32.mxu0 %v72
    %170 = vmatmul.mubr.f32.gmra.mrb[0].mxu0 %v31
    %v171 = vpop.f32.mrb[0].mxu0
    %v172 = vadd.f32 0.0, %v171
    %v173 = vpop.f32.mrb[0].mxu0
    %174 = vmatprep.mubr.f32.mxu0 %v75
    %175 = vmatmul.mubr.f32.gmra.mrb[0].mxu0 %v33
    %v176 = vpop.f32.mrb[0].mxu0
    %v177 = vadd.f32 0.0, %v176
    %v178 = vpop.f32.mrb[0].mxu0
    %179 = vmatprep.mubr.f32.mxu0 %v78
    %180 = vmatmul.mubr.f32.gmra.mrb[0].mxu0 %v35
    %v181 = vpop.f32.mrb[0].mxu0
    %v182 = vadd.f32 0.0, %v181
    %v183 = vpop.f32.mrb[0].mxu0
    %184 = vdwg.mxu0
    %v185 = vld [vmem:[%s2] sm:$0xff]
    %v186 = vld [vmem:[%s2 + $0x8] sm:$0xff]
    %v187 = vld [vmem:[%s2 + $0x10] sm:$0xff]
    %v188 = vld [vmem:[%s2 + $0x18] sm:$0xff]
    %v189 = vld [vmem:[%s2 + $0x20] sm:$0xff]
    %v190 = vld [vmem:[%s2 + $0x28] sm:$0xff]
    %v191 = vld [vmem:[%s2 + $0x30] sm:$0xff]
    %v192 = vld [vmem:[%s2 + $0x38] sm:$0xff]
    %v193 = vld [vmem:[%s2 + $0x40] sm:$0xff]
    %v194 = vld [vmem:[%s2 + $0x48] sm:$0xff]
    %v195 = vld [vmem:[%s2 + $0x50] sm:$0xff]
    %v196 = vld [vmem:[%s2 + $0x58] sm:$0xff]
    %v197 = vld [vmem:[%s2 + $0x60] sm:$0xff]
    %v198 = vld [vmem:[%s2 + $0x68] sm:$0xff]
    %v199 = vld [vmem:[%s2 + $0x70] sm:$0xff]
    %v200 = vld [vmem:[%s2 + $0x78] sm:$0xff]
    %vm201 = vcmask 261120
    %v203 = vsel %vm201, %v185, 0
    %v206 = vsel %vm201, %v186, 0
    %v209 = vsel %vm201, %v187, 0
    %v212 = vsel %vm201, %v188, 0
    %v215 = vsel %vm201, %v189, 0
    %v218 = vsel %vm201, %v190, 0
    %v221 = vsel %vm201, %v191, 0
    %v224 = vsel %vm201, %v192, 0
    %v227 = vsel %vm201, %v193, 0
    %v230 = vsel %vm201, %v194, 0
    %v233 = vsel %vm201, %v195, 0
    %v236 = vsel %vm201, %v196, 0
    %v239 = vsel %vm201, %v197, 0
    %v242 = vsel %vm201, %v198, 0
    %v245 = vsel %vm201, %v199, 0
    %v248 = vsel %vm201, %v200, 0
    %250 = vmatprep.subr.mxu0 0.0
    %251 = vmatpush1.msra.mxu0 %v147
    %252 = vmatprep.subr.mxu0 0.0
    %253 = vmatpush1.msra.mxu0 %v152
    %254 = vmatprep.subr.mxu0 0.0
    %255 = vmatpush1.msra.mxu0 %v157
    %256 = vmatprep.subr.mxu0 0.0
    %257 = vmatpush1.msra.mxu0 %v162
    %258 = vmatprep.subr.mxu0 0.0
    %259 = vmatpush1.msra.mxu0 0.0
    %260 = vmatprep.subr.mxu0 0.0
    %261 = vmatpush1.msra.mxu0 0.0
    %262 = vmatprep.subr.mxu0 0.0
    %263 = vmatpush1.msra.mxu0 0.0
    %264 = vmatprep.subr.mxu0 0.0
    %265 = vmatpush1.msra.mxu0 0.0
    %266 = vmatprep.subr.mxu0 0.0
    %267 = vmatpush1.msra.mxu0 0.0
    %268 = vmatprep.subr.mxu0 0.0
    %269 = vmatpush1.msra.mxu0 0.0
    %270 = vmatprep.subr.mxu0 0.0
    %271 = vmatpush1.msra.mxu0 0.0
    %272 = vmatprep.subr.mxu0 0.0
    %273 = vmatpush1.msra.mxu0 0.0
    %274 = vmatprep.subr.mxu0 0.0
    %275 = vmatpush1.msra.mxu0 0.0
    %276 = vmatprep.subr.mxu0 0.0
    %277 = vmatpush1.msra.mxu0 0.0
    %278 = vmatprep.subr.mxu0 0.0
    %279 = vmatpush1.msra.mxu0 0.0
    %280 = vmatprep.subr.mxu0 0.0
    %281 = vmatpush1.msra.mxu0 0.0
    %282 = vmatprep.subr.mxu0 0.0
    %283 = vmatpush1.msra.mxu0 0.0
    %284 = vmatprep.subr.mxu0 0.0
    %285 = vmatpush1.msra.mxu0 0.0
    %286 = vmatprep.subr.mxu0 0.0
    %287 = vmatpush1.msra.mxu0 0.0
    %288 = vmatprep.subr.mxu0 0.0
    %289 = vmatpush1.msra.mxu0 0.0
    %290 = vmatprep.subr.mxu0 0.0
    %291 = vmatpush1.msra.mxu0 0.0
    %292 = vmatprep.subr.mxu0 0.0
    %293 = vmatpush1.msra.mxu0 0.0
    %294 = vmatprep.subr.mxu0 0.0
    %295 = vmatpush1.msra.mxu0 0.0
    %296 = vmatprep.subr.mxu0 0.0
    %297 = vmatpush1.msra.mxu0 0.0
    %298 = vmatprep.subr.mxu0 0.0
    %299 = vmatpush1.msra.mxu0 0.0
    %300 = vmatprep.subr.mxu0 0.0
    %301 = vmatpush1.msra.mxu0 0.0
    %302 = vmatprep.subr.mxu0 0.0
    %303 = vmatpush1.msra.mxu0 0.0
    %304 = vmatprep.subr.mxu0 0.0
    %305 = vmatpush1.msra.mxu0 0.0
    %306 = vmatprep.subr.mxu0 0.0
    %307 = vmatpush1.msra.mxu0 0.0
    %308 = vmatprep.subr.mxu0 0.0
    %309 = vmatpush1.msra.mxu0 0.0
    %310 = vmatprep.subr.mxu0 0.0
    %311 = vmatpush1.msra.mxu0 0.0
    %312 = vmatprep.subr.mxu0 0.0
    %313 = vmatpush1.msra.mxu0 0.0
    %314 = vmatprep.mubr.f32.mxu0 0.0
    %315 = vmatmul.mubr.f32.gmra.mrb[0].mxu0 %v203
    %v316 = vpop.f32.mrb[0].mxu0
    %v317 = vadd.f32 0.0, %v316
    %v318 = vpop.f32.mrb[0].mxu0
    %319 = vmatprep.mubr.f32.mxu0 0.0
    %320 = vmatmul.mubr.f32.gmra.mrb[0].mxu0 %v206
    %v321 = vpop.f32.mrb[0].mxu0
    %v322 = vadd.f32 0.0, %v321
    %v323 = vpop.f32.mrb[0].mxu0
    %324 = vmatprep.mubr.f32.mxu0 0.0
    %325 = vmatmul.mubr.f32.gmra.mrb[0].mxu0 %v209
    %v326 = vpop.f32.mrb[0].mxu0
    %v327 = vadd.f32 0.0, %v326
    %v328 = vpop.f32.mrb[0].mxu0
    %329 = vmatprep.mubr.f32.mxu0 0.0
    %330 = vmatmul.mubr.f32.gmra.mrb[0].mxu0 %v212
    %v331 = vpop.f32.mrb[0].mxu0
    %v332 = vadd.f32 0.0, %v331
    %v333 = vpop.f32.mrb[0].mxu0
    %334 = vmatprep.mubr.f32.mxu0 0.0
    %335 = vmatmul.mubr.f32.gmra.mrb[0].mxu0 %v215
    %v336 = vpop.f32.mrb[0].mxu0
    %v337 = vadd.f32 0.0, %v336
    %v338 = vpop.f32.mrb[0].mxu0
    %339 = vmatprep.mubr.f32.mxu0 0.0
    %340 = vmatmul.mubr.f32.gmra.mrb[0].mxu0 %v218
    %v341 = vpop.f32.mrb[0].mxu0
    %v342 = vadd.f32 0.0, %v341
    %v343 = vpop.f32.mrb[0].mxu0
    %344 = vmatprep.mubr.f32.mxu0 0.0
    %345 = vmatmul.mubr.f32.gmra.mrb[0].mxu0 %v221
    %v346 = vpop.f32.mrb[0].mxu0
    %v347 = vadd.f32 0.0, %v346
    %v348 = vpop.f32.mrb[0].mxu0
    %349 = vmatprep.mubr.f32.mxu0 0.0
    %350 = vmatmul.mubr.f32.gmra.mrb[0].mxu0 %v224
    %v351 = vpop.f32.mrb[0].mxu0
    %v352 = vadd.f32 0.0, %v351
    %v353 = vpop.f32.mrb[0].mxu0
    %354 = vmatprep.mubr.f32.mxu0 0.0
    %355 = vmatmul.mubr.f32.gmra.mrb[0].mxu0 %v227
    %v356 = vpop.f32.mrb[0].mxu0
    %v357 = vadd.f32 0.0, %v356
    %v358 = vpop.f32.mrb[0].mxu0
    %359 = vmatprep.mubr.f32.mxu0 0.0
    %360 = vmatmul.mubr.f32.gmra.mrb[0].mxu0 %v230
    %v361 = vpop.f32.mrb[0].mxu0
    %v362 = vadd.f32 0.0, %v361
    %v363 = vpop.f32.mrb[0].mxu0
    %364 = vmatprep.mubr.f32.mxu0 0.0
    %365 = vmatmul.mubr.f32.gmra.mrb[0].mxu0 %v233
    %v366 = vpop.f32.mrb[0].mxu0
    %v367 = vadd.f32 0.0, %v366
    %v368 = vpop.f32.mrb[0].mxu0
    %369 = vmatprep.mubr.f32.mxu0 0.0
    %370 = vmatmul.mubr.f32.gmra.mrb[0].mxu0 %v236
    %v371 = vpop.f32.mrb[0].mxu0
    %v372 = vadd.f32 0.0, %v371
    %v373 = vpop.f32.mrb[0].mxu0
    %374 = vmatprep.mubr.f32.mxu0 0.0
    %375 = vmatmul.mubr.f32.gmra.mrb[0].mxu0 %v239
    %v376 = vpop.f32.mrb[0].mxu0
    %v377 = vadd.f32 0.0, %v376
    %v378 = vpop.f32.mrb[0].mxu0
    %379 = vmatprep.mubr.f32.mxu0 0.0
    %380 = vmatmul.mubr.f32.gmra.mrb[0].mxu0 %v242
    %v381 = vpop.f32.mrb[0].mxu0
    %v382 = vadd.f32 0.0, %v381
    %v383 = vpop.f32.mrb[0].mxu0
    %384 = vmatprep.mubr.f32.mxu0 0.0
    %385 = vmatmul.mubr.f32.gmra.mrb[0].mxu0 %v245
    %v386 = vpop.f32.mrb[0].mxu0
    %v387 = vadd.f32 0.0, %v386
    %v388 = vpop.f32.mrb[0].mxu0
    %389 = vmatprep.mubr.f32.mxu0 0.0
    %390 = vmatmul.mubr.f32.gmra.mrb[0].mxu0 %v248
    %v391 = vpop.f32.mrb[0].mxu0
    %v392 = vadd.f32 0.0, %v391
    %v393 = vpop.f32.mrb[0].mxu0
    %394 = vdwg.mxu0
    %v395 = vld [vmem:[%s3] sm:$0xff]
    %v396 = vld [vmem:[%s3 + $0x8] sm:$0xff]
    %v397 = vld [vmem:[%s3 + $0x10] sm:$0xff]
    %v398 = vld [vmem:[%s3 + $0x18] sm:$0xff]
    %v399 = vld [vmem:[%s3 + $0x20] sm:$0xff]
    %v400 = vld [vmem:[%s3 + $0x28] sm:$0xff]
    %v401 = vld [vmem:[%s3 + $0x30] sm:$0xff]
    %v402 = vld [vmem:[%s3 + $0x38] sm:$0xff]
    %v403 = vld [vmem:[%s3 + $0x40] sm:$0xff]
    %v404 = vld [vmem:[%s3 + $0x48] sm:$0xff]
    %v405 = vld [vmem:[%s3 + $0x50] sm:$0xff]
    %v406 = vld [vmem:[%s3 + $0x58] sm:$0xff]
    %v407 = vld [vmem:[%s3 + $0x60] sm:$0xff]
    %v408 = vld [vmem:[%s3 + $0x68] sm:$0xff]
    %v409 = vld [vmem:[%s3 + $0x70] sm:$0xff]
    %v410 = vld [vmem:[%s3 + $0x78] sm:$0xff]
    %v411 = vmul.f32 %v317, %v395
    %v412 = vmul.f32 %v322, %v396
    %v413 = vmul.f32 %v327, %v397
    %v414 = vmul.f32 %v332, %v398
    %v415 = vmul.f32 %v337, %v399
    %v416 = vmul.f32 %v342, %v400
    %v417 = vmul.f32 %v347, %v401
    %v418 = vmul.f32 %v352, %v402
    %v419 = vmul.f32 %v357, %v403
    %v420 = vmul.f32 %v362, %v404
    %v421 = vmul.f32 %v367, %v405
    %v422 = vmul.f32 %v372, %v406
    %v423 = vmul.f32 %v377, %v407
    %v424 = vmul.f32 %v382, %v408
    %v425 = vmul.f32 %v387, %v409
    %v426 = vmul.f32 %v392, %v410
    %v427 = vadd.f32 %v411, %v415
    %v428 = vadd.f32 %v412, %v416
    %v429 = vadd.f32 %v413, %v417
    %v430 = vadd.f32 %v414, %v418
    %v431 = vadd.f32 %v427, %v419
    %v432 = vadd.f32 %v428, %v420
    %v433 = vadd.f32 %v429, %v421
    %v434 = vadd.f32 %v430, %v422
    %v435 = vadd.f32 %v431, %v423
    %v436 = vadd.f32 %v432, %v424
    %v437 = vadd.f32 %v433, %v425
    %v438 = vadd.f32 %v434, %v426
    %v439 = vld [vmem:[%s4] sm:$0xff]
    %v440 = vld [vmem:[%s4 + $0x8] sm:$0xff]
    %v441 = vld [vmem:[%s4 + $0x10] sm:$0xff]
    %v442 = vld [vmem:[%s4 + $0x18] sm:$0xff]
    %v443 = vadd.f32 %v435, %v439
    %v444 = vadd.f32 %v436, %v440
    %v445 = vadd.f32 %v437, %v441
    %v446 = vadd.f32 %v438, %v442
    %v447 = vmax.f32 %v443, 0.0
    %v448 = vmax.f32 %v444, 0.0
    %v449 = vmax.f32 %v445, 0.0
    %v450 = vmax.f32 %v446, 0.0
    %vm451 = vcmask 408576
    %452 = vst.msk [vmem:[#allocation2] sm:$0xff] %vm451, %v447
    %453 = vst.msk [vmem:[#allocation2 + $0x8] sm:$0xff] %vm451, %v448
    %454 = vst.msk [vmem:[#allocation2 + $0x10] sm:$0xff] %vm451, %v449
    %455 = vst.msk [vmem:[#allocation2 + $0x18] sm:$0xff] %vm451, %v450
    %v456 = vld [vmem:[%s2] sm:$0xff]
    %v457 = vld [vmem:[%s2 + $0x8] sm:$0xff]
    %v458 = vld [vmem:[%s2 + $0x10] sm:$0xff]
    %v459 = vld [vmem:[%s2 + $0x18] sm:$0xff]
    %v460 = vld [vmem:[%s2 + $0x20] sm:$0xff]
    %v461 = vld [vmem:[%s2 + $0x28] sm:$0xff]
    %v462 = vld [vmem:[%s2 + $0x30] sm:$0xff]
    %v463 = vld [vmem:[%s2 + $0x38] sm:$0xff]
    %v464 = vld [vmem:[%s2 + $0x40] sm:$0xff]
    %v465 = vld [vmem:[%s2 + $0x48] sm:$0xff]
    %v466 = vld [vmem:[%s2 + $0x50] sm:$0xff]
    %v467 = vld [vmem:[%s2 + $0x58] sm:$0xff]
    %v468 = vld [vmem:[%s2 + $0x60] sm:$0xff]
    %v469 = vld [vmem:[%s2 + $0x68] sm:$0xff]
    %v470 = vld [vmem:[%s2 + $0x70] sm:$0xff]
    %v471 = vld [vmem:[%s2 + $0x78] sm:$0xff]
    %v473 = vsel %vm201, %v456, 0
    %v476 = vsel %vm201, %v457, 0
    %v479 = vsel %vm201, %v458, 0
    %v482 = vsel %vm201, %v459, 0
    %v485 = vsel %vm201, %v460, 0
    %v488 = vsel %vm201, %v461, 0
    %v491 = vsel %vm201, %v462, 0
    %v494 = vsel %vm201, %v463, 0
    %v497 = vsel %vm201, %v464, 0
    %v500 = vsel %vm201, %v465, 0
    %v503 = vsel %vm201, %v466, 0
    %v506 = vsel %vm201, %v467, 0
    %v509 = vsel %vm201, %v468, 0
    %v512 = vsel %vm201, %v469, 0
    %v515 = vsel %vm201, %v470, 0
    %v518 = vsel %vm201, %v471, 0
    %520 = vmatprep.subr.mxu0 0.0
    %521 = vmatpush1.msra.mxu0 %v167
    %522 = vmatprep.subr.mxu0 0.0
    %523 = vmatpush1.msra.mxu0 %v172
    %524 = vmatprep.subr.mxu0 0.0
    %525 = vmatpush1.msra.mxu0 %v177
    %526 = vmatprep.subr.mxu0 0.0
    %527 = vmatpush1.msra.mxu0 %v182
    %528 = vmatprep.subr.mxu0 0.0
    %529 = vmatpush1.msra.mxu0 0.0
    %530 = vmatprep.subr.mxu0 0.0
    %531 = vmatpush1.msra.mxu0 0.0
    %532 = vmatprep.subr.mxu0 0.0
    %533 = vmatpush1.msra.mxu0 0.0
    %534 = vmatprep.subr.mxu0 0.0
    %535 = vmatpush1.msra.mxu0 0.0
    %536 = vmatprep.subr.mxu0 0.0
    %537 = vmatpush1.msra.mxu0 0.0
    %538 = vmatprep.subr.mxu0 0.0
    %539 = vmatpush1.msra.mxu0 0.0
    %540 = vmatprep.subr.mxu0 0.0
    %541 = vmatpush1.msra.mxu0 0.0
    %542 = vmatprep.subr.mxu0 0.0
    %543 = vmatpush1.msra.mxu0 0.0
    %544 = vmatprep.subr.mxu0 0.0
    %545 = vmatpush1.msra.mxu0 0.0
    %546 = vmatprep.subr.mxu0 0.0
    %547 = vmatpush1.msra.mxu0 0.0
    %548 = vmatprep.subr.mxu0 0.0
    %549 = vmatpush1.msra.mxu0 0.0
    %550 = vmatprep.subr.mxu0 0.0
    %551 = vmatpush1.msra.mxu0 0.0
    %552 = vmatprep.subr.mxu0 0.0
    %553 = vmatpush1.msra.mxu0 0.0
    %554 = vmatprep.subr.mxu0 0.0
    %555 = vmatpush1.msra.mxu0 0.0
    %556 = vmatprep.subr.mxu0 0.0
    %557 = vmatpush1.msra.mxu0 0.0
    %558 = vmatprep.subr.mxu0 0.0
    %559 = vmatpush1.msra.mxu0 0.0
    %560 = vmatprep.subr.mxu0 0.0
    %561 = vmatpush1.msra.mxu0 0.0
    %562 = vmatprep.subr.mxu0 0.0
    %563 = vmatpush1.msra.mxu0 0.0
    %564 = vmatprep.subr.mxu0 0.0
    %565 = vmatpush1.msra.mxu0 0.0
    %566 = vmatprep.subr.mxu0 0.0
    %567 = vmatpush1.msra.mxu0 0.0
    %568 = vmatprep.subr.mxu0 0.0
    %569 = vmatpush1.msra.mxu0 0.0
    %570 = vmatprep.subr.mxu0 0.0
    %571 = vmatpush1.msra.mxu0 0.0
    %572 = vmatprep.subr.mxu0 0.0
    %573 = vmatpush1.msra.mxu0 0.0
    %574 = vmatprep.subr.mxu0 0.0
    %575 = vmatpush1.msra.mxu0 0.0
    %576 = vmatprep.subr.mxu0 0.0
    %577 = vmatpush1.msra.mxu0 0.0
    %578 = vmatprep.subr.mxu0 0.0
    %579 = vmatpush1.msra.mxu0 0.0
    %580 = vmatprep.subr.mxu0 0.0
    %581 = vmatpush1.msra.mxu0 0.0
    %582 = vmatprep.subr.mxu0 0.0
    %583 = vmatpush1.msra.mxu0 0.0
    %584 = vmatprep.mubr.f32.mxu0 0.0
    %585 = vmatmul.mubr.f32.gmra.mrb[0].mxu0 %v473
    %v586 = vpop.f32.mrb[0].mxu0
    %v587 = vadd.f32 0.0, %v586
    %v588 = vpop.f32.mrb[0].mxu0
    %589 = vmatprep.mubr.f32.mxu0 0.0
    %590 = vmatmul.mubr.f32.gmra.mrb[0].mxu0 %v476
    %v591 = vpop.f32.mrb[0].mxu0
    %v592 = vadd.f32 0.0, %v591
    %v593 = vpop.f32.mrb[0].mxu0
    %594 = vmatprep.mubr.f32.mxu0 0.0
    %595 = vmatmul.mubr.f32.gmra.mrb[0].mxu0 %v479
    %v596 = vpop.f32.mrb[0].mxu0
    %v597 = vadd.f32 0.0, %v596
    %v598 = vpop.f32.mrb[0].mxu0
    %599 = vmatprep.mubr.f32.mxu0 0.0
    %600 = vmatmul.mubr.f32.gmra.mrb[0].mxu0 %v482
    %v601 = vpop.f32.mrb[0].mxu0
    %v602 = vadd.f32 0.0, %v601
    %v603 = vpop.f32.mrb[0].mxu0
    %604 = vmatprep.mubr.f32.mxu0 0.0
    %605 = vmatmul.mubr.f32.gmra.mrb[0].mxu0 %v485
    %v606 = vpop.f32.mrb[0].mxu0
    %v607 = vadd.f32 0.0, %v606
    %v608 = vpop.f32.mrb[0].mxu0
    %609 = vmatprep.mubr.f32.mxu0 0.0
    %610 = vmatmul.mubr.f32.gmra.mrb[0].mxu0 %v488
    %v611 = vpop.f32.mrb[0].mxu0
    %v612 = vadd.f32 0.0, %v611
    %v613 = vpop.f32.mrb[0].mxu0
    %614 = vmatprep.mubr.f32.mxu0 0.0
    %615 = vmatmul.mubr.f32.gmra.mrb[0].mxu0 %v491
    %v616 = vpop.f32.mrb[0].mxu0
    %v617 = vadd.f32 0.0, %v616
    %v618 = vpop.f32.mrb[0].mxu0
    %619 = vmatprep.mubr.f32.mxu0 0.0
    %620 = vmatmul.mubr.f32.gmra.mrb[0].mxu0 %v494
    %v621 = vpop.f32.mrb[0].mxu0
    %v622 = vadd.f32 0.0, %v621
    %v623 = vpop.f32.mrb[0].mxu0
    %624 = vmatprep.mubr.f32.mxu0 0.0
    %625 = vmatmul.mubr.f32.gmra.mrb[0].mxu0 %v497
    %v626 = vpop.f32.mrb[0].mxu0
    %v627 = vadd.f32 0.0, %v626
    %v628 = vpop.f32.mrb[0].mxu0
    %629 = vmatprep.mubr.f32.mxu0 0.0
    %630 = vmatmul.mubr.f32.gmra.mrb[0].mxu0 %v500
    %v631 = vpop.f32.mrb[0].mxu0
    %v632 = vadd.f32 0.0, %v631
    %v633 = vpop.f32.mrb[0].mxu0
    %634 = vmatprep.mubr.f32.mxu0 0.0
    %635 = vmatmul.mubr.f32.gmra.mrb[0].mxu0 %v503
    %v636 = vpop.f32.mrb[0].mxu0
    %v637 = vadd.f32 0.0, %v636
    %v638 = vpop.f32.mrb[0].mxu0
    %639 = vmatprep.mubr.f32.mxu0 0.0
    %640 = vmatmul.mubr.f32.gmra.mrb[0].mxu0 %v506
    %v641 = vpop.f32.mrb[0].mxu0
    %v642 = vadd.f32 0.0, %v641
    %v643 = vpop.f32.mrb[0].mxu0
    %644 = vmatprep.mubr.f32.mxu0 0.0
    %645 = vmatmul.mubr.f32.gmra.mrb[0].mxu0 %v509
    %v646 = vpop.f32.mrb[0].mxu0
    %v647 = vadd.f32 0.0, %v646
    %v648 = vpop.f32.mrb[0].mxu0
    %649 = vmatprep.mubr.f32.mxu0 0.0
    %650 = vmatmul.mubr.f32.gmra.mrb[0].mxu0 %v512
    %v651 = vpop.f32.mrb[0].mxu0
    %v652 = vadd.f32 0.0, %v651
    %v653 = vpop.f32.mrb[0].mxu0
    %654 = vmatprep.mubr.f32.mxu0 0.0
    %655 = vmatmul.mubr.f32.gmra.mrb[0].mxu0 %v515
    %v656 = vpop.f32.mrb[0].mxu0
    %v657 = vadd.f32 0.0, %v656
    %v658 = vpop.f32.mrb[0].mxu0
    %659 = vmatprep.mubr.f32.mxu0 0.0
    %660 = vmatmul.mubr.f32.gmra.mrb[0].mxu0 %v518
    %v661 = vpop.f32.mrb[0].mxu0
    %v662 = vadd.f32 0.0, %v661
    %v663 = vpop.f32.mrb[0].mxu0
    %664 = vdwg.mxu0
    %v665 = vld [vmem:[%s3] sm:$0xff]
    %v666 = vld [vmem:[%s3 + $0x8] sm:$0xff]
    %v667 = vld [vmem:[%s3 + $0x10] sm:$0xff]
    %v668 = vld [vmem:[%s3 + $0x18] sm:$0xff]
    %v669 = vld [vmem:[%s3 + $0x20] sm:$0xff]
    %v670 = vld [vmem:[%s3 + $0x28] sm:$0xff]
    %v671 = vld [vmem:[%s3 + $0x30] sm:$0xff]
    %v672 = vld [vmem:[%s3 + $0x38] sm:$0xff]
    %v673 = vld [vmem:[%s3 + $0x40] sm:$0xff]
    %v674 = vld [vmem:[%s3 + $0x48] sm:$0xff]
    %v675 = vld [vmem:[%s3 + $0x50] sm:$0xff]
    %v676 = vld [vmem:[%s3 + $0x58] sm:$0xff]
    %v677 = vld [vmem:[%s3 + $0x60] sm:$0xff]
    %v678 = vld [vmem:[%s3 + $0x68] sm:$0xff]
    %v679 = vld [vmem:[%s3 + $0x70] sm:$0xff]
    %v680 = vld [vmem:[%s3 + $0x78] sm:$0xff]
    %v681 = vmul.f32 %v587, %v665
    %v682 = vmul.f32 %v592, %v666
    %v683 = vmul.f32 %v597, %v667
    %v684 = vmul.f32 %v602, %v668
    %v685 = vmul.f32 %v607, %v669
    %v686 = vmul.f32 %v612, %v670
    %v687 = vmul.f32 %v617, %v671
    %v688 = vmul.f32 %v622, %v672
    %v689 = vmul.f32 %v627, %v673
    %v690 = vmul.f32 %v632, %v674
    %v691 = vmul.f32 %v637, %v675
    %v692 = vmul.f32 %v642, %v676
    %v693 = vmul.f32 %v647, %v677
    %v694 = vmul.f32 %v652, %v678
    %v695 = vmul.f32 %v657, %v679
    %v696 = vmul.f32 %v662, %v680
    %v697 = vadd.f32 %v681, %v685
    %v698 = vadd.f32 %v682, %v686
    %v699 = vadd.f32 %v683, %v687
    %v700 = vadd.f32 %v684, %v688
    %v701 = vadd.f32 %v697, %v689
    %v702 = vadd.f32 %v698, %v690
    %v703 = vadd.f32 %v699, %v691
    %v704 = vadd.f32 %v700, %v692
    %v705 = vadd.f32 %v701, %v693
    %v706 = vadd.f32 %v702, %v694
    %v707 = vadd.f32 %v703, %v695
    %v708 = vadd.f32 %v704, %v696
    %v709 = vld [vmem:[%s4] sm:$0xff]
    %v710 = vld [vmem:[%s4 + $0x8] sm:$0xff]
    %v711 = vld [vmem:[%s4 + $0x10] sm:$0xff]
    %v712 = vld [vmem:[%s4 + $0x18] sm:$0xff]
    %v713 = vadd.f32 %v705, %v709
    %v714 = vadd.f32 %v706, %v710
    %v715 = vadd.f32 %v707, %v711
    %v716 = vadd.f32 %v708, %v712
    %v717 = vmax.f32 %v713, 0.0
    %v718 = vmax.f32 %v714, 0.0
    %v719 = vmax.f32 %v715, 0.0
    %v720 = vmax.f32 %v716, 0.0
    %721 = vst.msk [vmem:[#allocation2 + $0x20] sm:$0xff] %vm451, %v717
    %722 = vst.msk [vmem:[#allocation2 + $0x28] sm:$0xff] %vm451, %v718
    %723 = vst.msk [vmem:[#allocation2 + $0x30] sm:$0xff] %vm451, %v719
    %724 = vst.msk [vmem:[#allocation2 + $0x38] sm:$0xff] %vm451, %v720
    // Predicated region
    $region22: #{cpam_enc.1} parent=1 // pred_check
      _
    $region23: #{cpam_enc.1} parent=1 // pred_check_branch
      %726 = sbr.rel (0) target = $region25
    $region24: #{cpam_enc.1} parent=1 // pred_region
      %s728 = ssub.s32 1024, 1024
      %729 = vsyncadd [#allocation3], %s728
      %s730 = sshll.u32 [#allocation2], 4
      %s731 = int_to_ptr.vmem [resolvable:$true] %s730
      %736 = dma.vmem_to_hbm [thread:$0]  %s731, 1024, %s5, [#allocation3], 128, 128, 8
    $region25: #{cpam_enc.1} parent=1 // pred_fallthru
      _
    // Predicated region
    $region26: #{cpam_enc.1} parent=1 // pred_check
      _
    $region27: #{cpam_enc.1} parent=1 // pred_check_branch
      %738 = sbr.rel (0) target = $region29
    $region28: #{cpam_enc.1} parent=1 // pred_region
      %739 = dma.done [#allocation3], 1024
    $region29: #{cpam_enc.1} parent=1 // pred_fallthru
      _
    %740 = vsyncpa [#allocation3], 1

</llo_original>
